<compile_context>
chip_gen: v7x
topology: tpu7x:2x2x1
jax: 0.10.0
libtpu: 0.0.40
codegen_flags: <defaults>
</compile_context>

<pallas_src>
import jax
import jax.numpy as jnp
from jax.experimental import pallas as pl
from jax.experimental.pallas import tpu as pltpu


def _elu(x):
    # ELU, alpha=1 (PyTorch default).  exp goes to the EUP; under the select
    # exp(large)=inf is discarded harmlessly, so no clamp is needed.
    return jnp.where(x > 0.0, x, jnp.exp(x) - 1.0)


def nam_base_kernel(x_ref, a_ref,
                    w1_ref, b1_ref, w2_ref, b2_ref,
                    w3_ref, b3_ref, w4_ref, b4_ref,
                    wy1_ref, by1_ref, wy2_ref, by2_ref,
                    backbone_ref, yall_ref, ysel_ref):
    cdt = w1_ref.dtype          # matmul operand dtype (bf16 or f32)
    f32 = jnp.float32

    x = x_ref[...]
    # backbone: Linear -> ELU -> Linear -> ELU -> Linear -> ELU -> Linear
    h = _elu(jnp.dot(x, w1_ref[...], preferred_element_type=f32) + b1_ref[...])
    h = _elu(jnp.dot(h.astype(cdt), w2_ref[...], preferred_element_type=f32) + b2_ref[...])
    h = _elu(jnp.dot(h.astype(cdt), w3_ref[...], preferred_element_type=f32) + b3_ref[...])
    backbone = jnp.dot(h.astype(cdt), w4_ref[...], preferred_element_type=f32) + b4_ref[...]
    backbone_ref[...] = backbone

    # fused per-treatment heads:
    #   z     = backbone @ [wy1_0 | ... | wy1_{T-1}] + [by1_0 | ...]   (TM, T*H/2)
    #   y_all = z @ block_diag(wy2_0, ..., wy2_{T-1}) + [by2_0 ...]    (TM, T)
    z = jnp.dot(backbone.astype(cdt), wy1_ref[...],
                preferred_element_type=f32) + by1_ref[...]
    y_all = jnp.dot(z.astype(cdt), wy2_ref[...],
                    preferred_element_type=f32) + by2_ref[...]
    yall_ref[...] = y_all

    # treatment selection folded in: one-hot mask + lane reduce
    tm, num_t = yall_ref.shape
    t_iota = jax.lax.broadcasted_iota(jnp.int32, (tm, num_t), 1)
    onehot = t_iota == a_ref[...]                       # (TM,1) vs (TM,T)
    ysel_ref[...] = jnp.sum(jnp.where(onehot, y_all, 0.0), axis=1, keepdims=True)


def _round_up(n, m):
    return ((n + m - 1) // m) * m


def nam_base_forward(x, a, params, test=False, *, block_rows=1024, use_bf16=True):
    N, D = x.shape
    H = params["w1"].shape[1]
    T, _, H2 = params["wy1"].shape
    cdt = jnp.bfloat16 if use_bf16 else jnp.float32

    # ---- pack the per-treatment heads into lane-dense fused weights ----
    wy1_cat = jnp.swapaxes(params["wy1"], 0, 1).reshape(H, T * H2)     # (H, T*H2)
    by1_cat = params["by1"].reshape(1, T * H2)                          # (1, T*H2)
    eye_t = jnp.eye(T, dtype=jnp.float32)
    wy2_bd = (params["wy2"][:, :, 0][:, :, None]
              * eye_t[:, None, :]).reshape(T * H2, T)                   # block-diag (T*H2, T)
    by2_row = params["by2"].reshape(1, T)

    # ---- batch tiling: TM rows per step, weights VMEM-resident ----
    TM = _round_up(min(block_rows, _round_up(N, 8)), 8)
    N_pad = _round_up(N, TM)
    grid = (N_pad // TM,)

    x_p = jnp.pad(x, ((0, N_pad - N), (0, 0))).astype(cdt)
    a_p = jnp.pad(a.reshape(-1).astype(jnp.int32), (0, N_pad - N)).reshape(N_pad, 1)

    weights = dict(
        w1=params["w1"].astype(cdt), b1=params["b1"],
        w2=params["w2"].astype(cdt), b2=params["b2"],
        w3=params["w3"].astype(cdt), b3=params["b3"],
        w4=params["w4"].astype(cdt), b4=params["b4"],
        wy1=wy1_cat.astype(cdt), by1=by1_cat,
        wy2=wy2_bd.astype(cdt), by2=by2_row,
    )

    row_spec = lambda cols: pl.BlockSpec((TM, cols), lambda i: (i, 0))
    res_spec = lambda shape: pl.BlockSpec(shape, lambda i: (0, 0))   # resident, no re-DMA

    in_specs = [
        row_spec(D),                 # x
        row_spec(1),                 # a
        res_spec((D, H)), res_spec((1, H)),
        res_spec((H, H)), res_spec((1, H)),
        res_spec((H, H)), res_spec((1, H)),
        res_spec((H, H)), res_spec((1, H)),
        res_spec((H, T * H2)), res_spec((1, T * H2)),
        res_spec((T * H2, T)), res_spec((1, T)),
    ]
    out_specs = (row_spec(H), row_spec(T), row_spec(1))
    out_shape = (jax.ShapeDtypeStruct((N_pad, H), jnp.float32),
                 jax.ShapeDtypeStruct((N_pad, T), jnp.float32),
                 jax.ShapeDtypeStruct((N_pad, 1), jnp.float32))

    # advisory cost estimate
    itemsize = jnp.dtype(cdt).itemsize
    weight_bytes = sum(int(w.size) * w.dtype.itemsize for w in weights.values())
    flops = int(2 * N_pad * (D * H + 3 * H * H + H * T * H2 + T * H2 * T))
    bytes_accessed = int(N_pad * D * itemsize + N_pad * 4 + weight_bytes
                         + N_pad * (H + T + 1) * 4)
    cost = pl.CostEstimate(flops=flops, transcendentals=int(3 * N_pad * H),
                           bytes_accessed=bytes_accessed)

    backbone, y_all, y_sel = pl.pallas_call(
        nam_base_kernel,
        out_shape=out_shape,
        grid_spec=pltpu.PrefetchScalarGridSpec(
            num_scalar_prefetch=0,
            grid=grid,
            in_specs=in_specs,
            out_specs=out_specs,
        ),
        compiler_params=pltpu.CompilerParams(
            dimension_semantics=("parallel",)),
        cost_estimate=cost,
    )(x_p, a_p,
      weights["w1"], weights["b1"], weights["w2"], weights["b2"],
      weights["w3"], weights["b3"], weights["w4"], weights["b4"],
      weights["wy1"], weights["by1"], weights["wy2"], weights["by2"])

    backbone = backbone[:N]
    y_sel = y_sel[:N]
    if test:
        return backbone, y_sel, y_all[:N][:, :, None]     # (N, T, 1)
    return backbone, y_sel


def init_params(key, input_size, hidden_size, num_treatment):
    h2 = hidden_size // 2
    ks = jax.random.split(key, 16)

    def lin(k, fan_in, fan_out):
        bound = 1.0 / jnp.sqrt(fan_in)
        kw, kb = jax.random.split(k)
        w = jax.random.uniform(kw, (fan_in, fan_out), jnp.float32, -bound, bound)
        b = jax.random.uniform(kb, (1, fan_out), jnp.float32, -bound, bound)
        return w, b

    w1, b1 = lin(ks[0], input_size, hidden_size)
    w2, b2 = lin(ks[1], hidden_size, hidden_size)
    w3, b3 = lin(ks[2], hidden_size, hidden_size)
    w4, b4 = lin(ks[3], hidden_size, hidden_size)

    wy1_list, by1_list, wy2_list, by2_list = [], [], [], []
    for t in range(num_treatment):
        wa, ba = lin(ks[4 + 2 * t], hidden_size, h2)
        wb, bb = lin(ks[5 + 2 * t], h2, 1)
        wy1_list.append(wa); by1_list.append(ba)
        wy2_list.append(wb); by2_list.append(bb)

    return dict(
        w1=w1, b1=b1, w2=w2, b2=b2, w3=w3, b3=b3, w4=w4, b4=b4,
        wy1=jnp.stack(wy1_list),       # (T, H, H/2)
        by1=jnp.stack(by1_list),       # (T, 1, H/2)
        wy2=jnp.stack(wy2_list),       # (T, H/2, 1)
        by2=jnp.stack(by2_list),       # (T, 1, 1)
    )


def reference_forward(x, a, params):
    # plain-JAX f32 reference for correctness checking
    h = _elu(x @ params["w1"] + params["b1"])
    h = _elu(h @ params["w2"] + params["b2"])
    h = _elu(h @ params["w3"] + params["b3"])
    backbone = h @ params["w4"] + params["b4"]
    ys = []
    for k in range(params["wy1"].shape[0]):
        z = backbone @ params["wy1"][k] + params["by1"][k]
        ys.append(z @ params["wy2"][k] + params["by2"][k])
    y_all = jnp.concatenate(ys, axis=1)
    a_idx = a.reshape(-1).astype(jnp.int32)
    y_sel = jnp.take_along_axis(y_all, a_idx[:, None], axis=1)
    return backbone, y_sel, y_all


if __name__ == "__main__":
    N, INPUT_SIZE, HIDDEN, T = 8, 16, 32, 2

    key = jax.random.PRNGKey(0)
    k_params, k_x, k_a = jax.random.split(key, 3)
    params = init_params(k_params, INPUT_SIZE, HIDDEN, T)
    x = jax.random.normal(k_x, (N, INPUT_SIZE), jnp.float32)
    a = jax.random.randint(k_a, (N,), 0, T)

    ref_backbone, ref_y, ref_yall = reference_forward(x, a, params)

    # exact-precision path (f32 matmul operands) — tight check, test=True branch
    bb32, y32, yall32 = nam_base_forward(x, a, params, test=True, use_bf16=False)
    bb32, y32, yall32 = jax.block_until_ready((bb32, y32, yall32))
    assert bb32.shape == (N, HIDDEN) and y32.shape == (N, 1) and yall32.shape == (N, T, 1)
    assert jnp.allclose(bb32, ref_backbone, atol=1e-5, rtol=1e-5)
    assert jnp.allclose(y32, ref_y, atol=1e-5, rtol=1e-5)
    assert jnp.allclose(yall32[:, :, 0], ref_yall, atol=1e-5, rtol=1e-5)

    # bf16 matmul operands (default fast path on v6e/v7x) — loose check
    bb16, y16 = nam_base_forward(x, a, params, test=False, use_bf16=True)
    bb16, y16 = jax.block_until_ready((bb16, y16))
    assert bb16.shape == (N, HIDDEN) and y16.shape == (N, 1)
    assert jnp.allclose(bb16, ref_backbone, atol=5e-2, rtol=5e-2)
    assert jnp.allclose(y16, ref_y, atol=5e-2, rtol=5e-2)

    # non-divisible batch with a small tile to exercise padding + multi-step grid
    N2 = 20
    x2 = jax.random.normal(jax.random.PRNGKey(1), (N2, INPUT_SIZE), jnp.float32)
    a2 = jax.random.randint(jax.random.PRNGKey(2), (N2,), 0, T)
    ref_bb2, ref_y2, _ = reference_forward(x2, a2, params)
    bb2, y2 = nam_base_forward(x2, a2, params, use_bf16=False, block_rows=8)
    bb2, y2 = jax.block_until_ready((bb2, y2))
    assert jnp.allclose(bb2, ref_bb2, atol=1e-5, rtol=1e-5)
    assert jnp.allclose(y2, ref_y2, atol=1e-5, rtol=1e-5)

    print("KERNEL_OK")
</pallas_src>

<mosaic_0001>
module attributes {stable_mosaic.version = 11 : i64} {
  func.func @nam_base_kernel(%arg0: i32, %arg1: memref<8x16xf32, #tpu.memory_space<vmem>>, %arg2: memref<8x1xi32, #tpu.memory_space<vmem>>, %arg3: memref<16x32xf32, #tpu.memory_space<vmem>>, %arg4: memref<1x32xf32, #tpu.memory_space<vmem>>, %arg5: memref<32x32xf32, #tpu.memory_space<vmem>>, %arg6: memref<1x32xf32, #tpu.memory_space<vmem>>, %arg7: memref<32x32xf32, #tpu.memory_space<vmem>>, %arg8: memref<1x32xf32, #tpu.memory_space<vmem>>, %arg9: memref<32x32xf32, #tpu.memory_space<vmem>>, %arg10: memref<1x32xf32, #tpu.memory_space<vmem>>, %arg11: memref<32x32xf32, #tpu.memory_space<vmem>>, %arg12: memref<1x32xf32, #tpu.memory_space<vmem>>, %arg13: memref<32x2xf32, #tpu.memory_space<vmem>>, %arg14: memref<1x2xf32, #tpu.memory_space<vmem>>, %arg15: memref<8x32xf32, #tpu.memory_space<vmem>>, %arg16: memref<8x2xf32, #tpu.memory_space<vmem>>, %arg17: memref<8x1xf32, #tpu.memory_space<vmem>>) attributes {dimension_semantics = [#tpu.dimension_semantics<parallel>], iteration_bounds = array<i64: 1>, scalar_prefetch = 0 : i64, scratch_operands = 0 : i64, tpu.core_type = #tpu.core_type<tc>, window_params = [{transform_indices = @transform_0, window_bounds = array<i64: 8, 16>}, {transform_indices = @transform_1, window_bounds = array<i64: 8, 1>}, {pipeline_mode = #tpu.pipeline_mode<synchronous>, transform_indices = @transform_2, window_bounds = array<i64: 16, 32>}, {pipeline_mode = #tpu.pipeline_mode<synchronous>, transform_indices = @transform_3, window_bounds = array<i64: 1, 32>}, {pipeline_mode = #tpu.pipeline_mode<synchronous>, transform_indices = @transform_4, window_bounds = array<i64: 32, 32>}, {pipeline_mode = #tpu.pipeline_mode<synchronous>, transform_indices = @transform_5, window_bounds = array<i64: 1, 32>}, {pipeline_mode = #tpu.pipeline_mode<synchronous>, transform_indices = @transform_6, window_bounds = array<i64: 32, 32>}, {pipeline_mode = #tpu.pipeline_mode<synchronous>, transform_indices = @transform_7, window_bounds = array<i64: 1, 32>}, {pipeline_mode = #tpu.pipeline_mode<synchronous>, transform_indices = @transform_8, window_bounds = array<i64: 32, 32>}, {pipeline_mode = #tpu.pipeline_mode<synchronous>, transform_indices = @transform_9, window_bounds = array<i64: 1, 32>}, {pipeline_mode = #tpu.pipeline_mode<synchronous>, transform_indices = @transform_10, window_bounds = array<i64: 32, 32>}, {pipeline_mode = #tpu.pipeline_mode<synchronous>, transform_indices = @transform_11, window_bounds = array<i64: 1, 32>}, {pipeline_mode = #tpu.pipeline_mode<synchronous>, transform_indices = @transform_12, window_bounds = array<i64: 32, 2>}, {pipeline_mode = #tpu.pipeline_mode<synchronous>, transform_indices = @transform_13, window_bounds = array<i64: 1, 2>}, {transform_indices = @transform_14, window_bounds = array<i64: 8, 32>}, {transform_indices = @transform_15, window_bounds = array<i64: 8, 2>}, {transform_indices = @transform_16, window_bounds = array<i64: 8, 1>}]} {
    %c0 = arith.constant 0 : index
    %c0_0 = arith.constant 0 : index
    %0 = vector.load %arg1[%c0, %c0_0] : memref<8x16xf32, #tpu.memory_space<vmem>>, vector<8x16xf32>
    %c0_1 = arith.constant 0 : index
    %c0_2 = arith.constant 0 : index
    %1 = vector.load %arg3[%c0_1, %c0_2] : memref<16x32xf32, #tpu.memory_space<vmem>>, vector<16x32xf32>
    %cst = arith.constant dense<0.000000e+00> : vector<8x32xf32>
    %2 = tpu.matmul %0, %1, %cst {dimension_numbers = #tpu.dot_dimension_numbers<[1], [0], [0], [1], [0, 0, 1, 1], [], []>} : vector<8x16xf32>, vector<16x32xf32>, vector<8x32xf32> -> vector<8x32xf32>
    %c0_3 = arith.constant 0 : index
    %c0_4 = arith.constant 0 : index
    %3 = vector.load %arg4[%c0_3, %c0_4] : memref<1x32xf32, #tpu.memory_space<vmem>>, vector<1x32xf32>
    %4 = vector.broadcast %3 : vector<1x32xf32> to vector<8x32xf32>
    %5 = arith.addf %2, %4 : vector<8x32xf32>
    %cst_5 = arith.constant 0.000000e+00 : f32
    %6 = vector.broadcast %cst_5 : f32 to vector<8x32xf32>
    %7 = arith.cmpf ogt, %5, %6 : vector<8x32xf32>
    %8 = math.exp %5 : vector<8x32xf32>
    %cst_6 = arith.constant 1.000000e+00 : f32
    %9 = vector.broadcast %cst_6 : f32 to vector<8x32xf32>
    %10 = arith.subf %8, %9 : vector<8x32xf32>
    %11 = arith.select %7, %5, %10 : vector<8x32xi1>, vector<8x32xf32>
    %c0_7 = arith.constant 0 : index
    %c0_8 = arith.constant 0 : index
    %12 = vector.load %arg5[%c0_7, %c0_8] : memref<32x32xf32, #tpu.memory_space<vmem>>, vector<32x32xf32>
    %cst_9 = arith.constant dense<0.000000e+00> : vector<8x32xf32>
    %13 = tpu.matmul %11, %12, %cst_9 {dimension_numbers = #tpu.dot_dimension_numbers<[1], [0], [0], [1], [0, 0, 1, 1], [], []>} : vector<8x32xf32>, vector<32x32xf32>, vector<8x32xf32> -> vector<8x32xf32>
    %c0_10 = arith.constant 0 : index
    %c0_11 = arith.constant 0 : index
    %14 = vector.load %arg6[%c0_10, %c0_11] : memref<1x32xf32, #tpu.memory_space<vmem>>, vector<1x32xf32>
    %15 = vector.broadcast %14 : vector<1x32xf32> to vector<8x32xf32>
    %16 = arith.addf %13, %15 : vector<8x32xf32>
    %cst_12 = arith.constant 0.000000e+00 : f32
    %17 = vector.broadcast %cst_12 : f32 to vector<8x32xf32>
    %18 = arith.cmpf ogt, %16, %17 : vector<8x32xf32>
    %19 = math.exp %16 : vector<8x32xf32>
    %cst_13 = arith.constant 1.000000e+00 : f32
    %20 = vector.broadcast %cst_13 : f32 to vector<8x32xf32>
    %21 = arith.subf %19, %20 : vector<8x32xf32>
    %22 = arith.select %18, %16, %21 : vector<8x32xi1>, vector<8x32xf32>
    %c0_14 = arith.constant 0 : index
    %c0_15 = arith.constant 0 : index
    %23 = vector.load %arg7[%c0_14, %c0_15] : memref<32x32xf32, #tpu.memory_space<vmem>>, vector<32x32xf32>
    %cst_16 = arith.constant dense<0.000000e+00> : vector<8x32xf32>
    %24 = tpu.matmul %22, %23, %cst_16 {dimension_numbers = #tpu.dot_dimension_numbers<[1], [0], [0], [1], [0, 0, 1, 1], [], []>} : vector<8x32xf32>, vector<32x32xf32>, vector<8x32xf32> -> vector<8x32xf32>
    %c0_17 = arith.constant 0 : index
    %c0_18 = arith.constant 0 : index
    %25 = vector.load %arg8[%c0_17, %c0_18] : memref<1x32xf32, #tpu.memory_space<vmem>>, vector<1x32xf32>
    %26 = vector.broadcast %25 : vector<1x32xf32> to vector<8x32xf32>
    %27 = arith.addf %24, %26 : vector<8x32xf32>
    %cst_19 = arith.constant 0.000000e+00 : f32
    %28 = vector.broadcast %cst_19 : f32 to vector<8x32xf32>
    %29 = arith.cmpf ogt, %27, %28 : vector<8x32xf32>
    %30 = math.exp %27 : vector<8x32xf32>
    %cst_20 = arith.constant 1.000000e+00 : f32
    %31 = vector.broadcast %cst_20 : f32 to vector<8x32xf32>
    %32 = arith.subf %30, %31 : vector<8x32xf32>
    %33 = arith.select %29, %27, %32 : vector<8x32xi1>, vector<8x32xf32>
    %c0_21 = arith.constant 0 : index
    %c0_22 = arith.constant 0 : index
    %34 = vector.load %arg9[%c0_21, %c0_22] : memref<32x32xf32, #tpu.memory_space<vmem>>, vector<32x32xf32>
    %cst_23 = arith.constant dense<0.000000e+00> : vector<8x32xf32>
    %35 = tpu.matmul %33, %34, %cst_23 {dimension_numbers = #tpu.dot_dimension_numbers<[1], [0], [0], [1], [0, 0, 1, 1], [], []>} : vector<8x32xf32>, vector<32x32xf32>, vector<8x32xf32> -> vector<8x32xf32>
    %c0_24 = arith.constant 0 : index
    %c0_25 = arith.constant 0 : index
    %36 = vector.load %arg10[%c0_24, %c0_25] : memref<1x32xf32, #tpu.memory_space<vmem>>, vector<1x32xf32>
    %37 = vector.broadcast %36 : vector<1x32xf32> to vector<8x32xf32>
    %38 = arith.addf %35, %37 : vector<8x32xf32>
    %c0_26 = arith.constant 0 : index
    %c0_27 = arith.constant 0 : index
    %39 = vector.load %arg15[%c0_26, %c0_27] : memref<8x32xf32, #tpu.memory_space<vmem>>, vector<8x32xf32>
    tpu.vector_store %arg15[%c0_26, %c0_27], %38 {strides = array<i32>} : memref<8x32xf32, #tpu.memory_space<vmem>>, vector<8x32xf32>,
    %c0_28 = arith.constant 0 : index
    %c0_29 = arith.constant 0 : index
    %40 = vector.load %arg11[%c0_28, %c0_29] : memref<32x32xf32, #tpu.memory_space<vmem>>, vector<32x32xf32>
    %cst_30 = arith.constant dense<0.000000e+00> : vector<8x32xf32>
    %41 = tpu.matmul %38, %40, %cst_30 {dimension_numbers = #tpu.dot_dimension_numbers<[1], [0], [0], [1], [0, 0, 1, 1], [], []>} : vector<8x32xf32>, vector<32x32xf32>, vector<8x32xf32> -> vector<8x32xf32>
    %c0_31 = arith.constant 0 : index
    %c0_32 = arith.constant 0 : index
    %42 = vector.load %arg12[%c0_31, %c0_32] : memref<1x32xf32, #tpu.memory_space<vmem>>, vector<1x32xf32>
    %43 = vector.broadcast %42 : vector<1x32xf32> to vector<8x32xf32>
    %44 = arith.addf %41, %43 : vector<8x32xf32>
    %c0_33 = arith.constant 0 : index
    %c0_34 = arith.constant 0 : index
    %45 = vector.load %arg13[%c0_33, %c0_34] : memref<32x2xf32, #tpu.memory_space<vmem>>, vector<32x2xf32>
    %cst_35 = arith.constant dense<0.000000e+00> : vector<8x2xf32>
    %46 = tpu.matmul %44, %45, %cst_35 {dimension_numbers = #tpu.dot_dimension_numbers<[1], [0], [0], [1], [0, 0, 1, 1], [], []>} : vector<8x32xf32>, vector<32x2xf32>, vector<8x2xf32> -> vector<8x2xf32>
    %c0_36 = arith.constant 0 : index
    %c0_37 = arith.constant 0 : index
    %47 = vector.load %arg14[%c0_36, %c0_37] : memref<1x2xf32, #tpu.memory_space<vmem>>, vector<1x2xf32>
    %48 = vector.broadcast %47 : vector<1x2xf32> to vector<8x2xf32>
    %49 = arith.addf %46, %48 : vector<8x2xf32>
    %c0_38 = arith.constant 0 : index
    %c0_39 = arith.constant 0 : index
    %50 = vector.load %arg16[%c0_38, %c0_39] : memref<8x2xf32, #tpu.memory_space<vmem>>, vector<8x2xf32>
    tpu.vector_store %arg16[%c0_38, %c0_39], %49 {strides = array<i32>} : memref<8x2xf32, #tpu.memory_space<vmem>>, vector<8x2xf32>,
    %51 = tpu.iota {dimensions = array<i32: 1>} : vector<8x2xi32>
    %c0_40 = arith.constant 0 : index
    %c0_41 = arith.constant 0 : index
    %52 = vector.load %arg2[%c0_40, %c0_41] : memref<8x1xi32, #tpu.memory_space<vmem>>, vector<8x1xi32>
    %53 = vector.broadcast %52 : vector<8x1xi32> to vector<8x2xi32>
    %54 = arith.cmpi eq, %51, %53 : vector<8x2xi32>
    %cst_42 = arith.constant 0.000000e+00 : f32
    %55 = vector.broadcast %cst_42 : f32 to vector<8x2xf32>
    %56 = arith.select %54, %49, %55 : vector<8x2xi1>, vector<8x2xf32>
    %cst_43 = arith.constant dense<0.000000e+00> : vector<8xf32>
    %57 = vector.multi_reduction <add>, %56, %cst_43 [1] : vector<8x2xf32> to vector<8xf32>
    %58 = vector.shape_cast %57 : vector<8xf32> to vector<8x1xf32>
    %c0_44 = arith.constant 0 : index
    %c0_45 = arith.constant 0 : index
    %59 = vector.load %arg17[%c0_44, %c0_45] : memref<8x1xf32, #tpu.memory_space<vmem>>, vector<8x1xf32>
    tpu.vector_store %arg17[%c0_44, %c0_45], %58 {strides = array<i32>} : memref<8x1xf32, #tpu.memory_space<vmem>>, vector<8x1xf32>,
    return
  }
  func.func @transform_0(%arg0: i32) -> (i32, i32) {
    %c0_i32 = arith.constant 0 : i32
    %c0_i32_0 = arith.constant 0 : i32
    return %arg0, %c0_i32 : i32, i32
  }
  func.func @transform_1(%arg0: i32) -> (i32, i32) {
    %c0_i32 = arith.constant 0 : i32
    %c0_i32_0 = arith.constant 0 : i32
    return %arg0, %c0_i32 : i32, i32
  }
  func.func @transform_2(%arg0: i32) -> (i32, i32) {
    %c0_i32 = arith.constant 0 : i32
    %c0_i32_0 = arith.constant 0 : i32
    %c0_i32_1 = arith.constant 0 : i32
    return %c0_i32, %c0_i32_0 : i32, i32
  }
  func.func @transform_3(%arg0: i32) -> (i32, i32) {
    %c0_i32 = arith.constant 0 : i32
    %c0_i32_0 = arith.constant 0 : i32
    %c0_i32_1 = arith.constant 0 : i32
    return %c0_i32, %c0_i32_0 : i32, i32
  }
  func.func @transform_4(%arg0: i32) -> (i32, i32) {
    %c0_i32 = arith.constant 0 : i32
    %c0_i32_0 = arith.constant 0 : i32
    %c0_i32_1 = arith.constant 0 : i32
    return %c0_i32, %c0_i32_0 : i32, i32
  }
  func.func @transform_5(%arg0: i32) -> (i32, i32) {
    %c0_i32 = arith.constant 0 : i32
    %c0_i32_0 = arith.constant 0 : i32
    %c0_i32_1 = arith.constant 0 : i32
    return %c0_i32, %c0_i32_0 : i32, i32
  }
  func.func @transform_6(%arg0: i32) -> (i32, i32) {
    %c0_i32 = arith.constant 0 : i32
    %c0_i32_0 = arith.constant 0 : i32
    %c0_i32_1 = arith.constant 0 : i32
    return %c0_i32, %c0_i32_0 : i32, i32
  }
  func.func @transform_7(%arg0: i32) -> (i32, i32) {
    %c0_i32 = arith.constant 0 : i32
    %c0_i32_0 = arith.constant 0 : i32
    %c0_i32_1 = arith.constant 0 : i32
    return %c0_i32, %c0_i32_0 : i32, i32
  }
  func.func @transform_8(%arg0: i32) -> (i32, i32) {
    %c0_i32 = arith.constant 0 : i32
    %c0_i32_0 = arith.constant 0 : i32
    %c0_i32_1 = arith.constant 0 : i32
    return %c0_i32, %c0_i32_0 : i32, i32
  }
  func.func @transform_9(%arg0: i32) -> (i32, i32) {
    %c0_i32 = arith.constant 0 : i32
    %c0_i32_0 = arith.constant 0 : i32
    %c0_i32_1 = arith.constant 0 : i32
    return %c0_i32, %c0_i32_0 : i32, i32
  }
  func.func @transform_10(%arg0: i32) -> (i32, i32) {
    %c0_i32 = arith.constant 0 : i32
    %c0_i32_0 = arith.constant 0 : i32
    %c0_i32_1 = arith.constant 0 : i32
    return %c0_i32, %c0_i32_0 : i32, i32
  }
  func.func @transform_11(%arg0: i32) -> (i32, i32) {
    %c0_i32 = arith.constant 0 : i32
    %c0_i32_0 = arith.constant 0 : i32
    %c0_i32_1 = arith.constant 0 : i32
    return %c0_i32, %c0_i32_0 : i32, i32
  }
  func.func @transform_12(%arg0: i32) -> (i32, i32) {
    %c0_i32 = arith.constant 0 : i32
    %c0_i32_0 = arith.constant 0 : i32
    %c0_i32_1 = arith.constant 0 : i32
    return %c0_i32, %c0_i32_0 : i32, i32
  }
  func.func @transform_13(%arg0: i32) -> (i32, i32) {
    %c0_i32 = arith.constant 0 : i32
    %c0_i32_0 = arith.constant 0 : i32
    %c0_i32_1 = arith.constant 0 : i32
    return %c0_i32, %c0_i32_0 : i32, i32
  }
  func.func @transform_14(%arg0: i32) -> (i32, i32) {
    %c0_i32 = arith.constant 0 : i32
    %c0_i32_0 = arith.constant 0 : i32
    return %arg0, %c0_i32 : i32, i32
  }
  func.func @transform_15(%arg0: i32) -> (i32, i32) {
    %c0_i32 = arith.constant 0 : i32
    %c0_i32_0 = arith.constant 0 : i32
    return %arg0, %c0_i32 : i32, i32
  }
  func.func @transform_16(%arg0: i32) -> (i32, i32) {
    %c0_i32 = arith.constant 0 : i32
    %c0_i32_0 = arith.constant 0 : i32
    return %arg0, %c0_i32 : i32, i32
  }
}

</mosaic_0001>

<llo_original>
// kernel: tpu_custom_call.1
$region0: #{tpu_custom_call.1}
  #allocation0 [shape = 'u32[]', space=smem, size = 0x4, offset = 0x4, fixed_abs, tag = 'smem constant byte address 0x4 - core index']
  #allocation1 [shape = 'u32[144,128]{1,0:T(1,128)}', space=vmem, size = 0x12000, scoped, tag = 'internal scratch']
  %s0 = inlined_call_operand.hbm [shape: f32[8,16], index: 0, kind: input, shape index: {}]
  %s1 = inlined_call_operand.vmem [shape: s32[8,1], index: 1, kind: input, shape index: {}]
  %s2 = inlined_call_operand.hbm [shape: f32[16,32], index: 2, kind: input, shape index: {}]
  %s3 = inlined_call_operand.vmem [shape: f32[1,32], index: 3, kind: input, shape index: {}]
  %s4 = inlined_call_operand.vmem [shape: f32[32,32], index: 4, kind: input, shape index: {}]
  %s5 = inlined_call_operand.hbm [shape: f32[1,32], index: 5, kind: input, shape index: {}]
  %s6 = inlined_call_operand.vmem [shape: f32[32,32], index: 6, kind: input, shape index: {}]
  %s7 = inlined_call_operand.vmem [shape: f32[1,32], index: 7, kind: input, shape index: {}]
  %s8 = inlined_call_operand.hbm [shape: f32[32,32], index: 8, kind: input, shape index: {}]
  %s9 = inlined_call_operand.vmem [shape: f32[1,32], index: 9, kind: input, shape index: {}]
  %s10 = inlined_call_operand.hbm [shape: f32[32,32], index: 10, kind: input, shape index: {}]
  %s11 = inlined_call_operand.vmem [shape: f32[1,32], index: 11, kind: input, shape index: {}]
  %s12 = inlined_call_operand.vmem [shape: f32[32,2], index: 12, kind: input, shape index: {}]
  %s13 = inlined_call_operand.vmem [shape: f32[1,2], index: 13, kind: input, shape index: {}]
  %s14 = inlined_call_operand.hbm [shape: f32[8,32], index: 14, kind: output, shape index: {0}]
  %s15 = inlined_call_operand.vmem [shape: f32[8,2], index: 15, kind: output, shape index: {1}]
  %s16 = inlined_call_operand.vmem [shape: f32[8,1], index: 16, kind: output, shape index: {2}]
  %17 = xla_tuple %s14, %s15, %s16
  %s18 = sld [smem:[#allocation0]]
  $region102: #{tpu_custom_call.1} parent=0
    _
  %s20 = ssub.s32 1, %s18
  %s21 = scalar_select 0, %s20, %s18
  $region1: #{tpu_custom_call.1} parent=0
    #allocation2 [shape = 'u8[4096]{0}', space=vmem, size = 0x1000, scoped, tag = 'input window, operand 0, single buffered']
    #allocation3 [shape = 's32[1]{0}', space=sflag, size = 0x4, scoped, tag = 'scoped memory for tpu_custom_call.1']
    #allocation4 [shape = 's32[1]{0}', space=sflag, size = 0x4, scoped, tag = 'scoped memory for tpu_custom_call.1']
    #allocation5 [shape = 'u8[8192]{0}', space=vmem, size = 0x2000, scoped, tag = 'input window, operand 2, single buffered']
    #allocation6 [shape = 's32[1]{0}', space=sflag, size = 0x4, scoped, tag = 'scoped memory for tpu_custom_call.1']
    #allocation7 [shape = 'u8[512]{0}', space=vmem, size = 0x400, scoped, tag = 'input window, operand 5, single buffered']
    #allocation8 [shape = 'u8[16384]{0}', space=vmem, size = 0x4000, scoped, tag = 'input window, operand 8, single buffered']
    #allocation9 [shape = 's32[1]{0}', space=sflag, size = 0x4, scoped, tag = 'scoped memory for tpu_custom_call.1']
    #allocation10 [shape = 'u8[16384]{0}', space=vmem, size = 0x4000, scoped, tag = 'input window, operand 10, single buffered']
    #allocation11 [shape = 'u8[4096]{0}', space=vmem, size = 0x1000, scoped, tag = 'output window, operand 0, single buffered']
    %22 = vsyncpa [#allocation3], 0
    %23 = vsyncpa [#allocation6], 0
    %24 = vsyncpa [#allocation9], 0
    %25 = vsyncpa [#allocation4], 0
    // Predicated region
    $region2: #{tpu_custom_call.1} parent=1 // pred_check
      _
    $region3: #{tpu_custom_call.1} parent=1 // pred_check_branch
      %27 = sbr.rel (0) target = $region5
    $region4: #{tpu_custom_call.1} parent=1 // pred_region
      %s29 = ssub.s32 128, 128
      %30 = vsyncadd [#allocation3], %s29
      %s32 = sshll.u32 [#allocation2], 4
      %s33 = int_to_ptr.vmem [resolvable:$true] %s32
      %35 = dma.hbm_to_vmem [thread:$0]  %s0, 128, %s33, [#allocation3]
    $region5: #{tpu_custom_call.1} parent=1 // pred_fallthru
      _
    // Predicated region
    $region6: #{tpu_custom_call.1} parent=1 // pred_check
      _
    $region7: #{tpu_custom_call.1} parent=1 // pred_check_branch
      %37 = sbr.rel (0) target = $region9
    $region8: #{tpu_custom_call.1} parent=1 // pred_region
      _
    $region9: #{tpu_custom_call.1} parent=1 // pred_fallthru
      _
    // Predicated region
    $region10: #{tpu_custom_call.1} parent=1 // pred_check
      _
    $region11: #{tpu_custom_call.1} parent=1 // pred_check_branch
      %39 = sbr.rel (0) target = $region13
    $region12: #{tpu_custom_call.1} parent=1 // pred_region
      %s41 = ssub.s32 256, 256
      %42 = vsyncadd [#allocation6], %s41
      %s43 = sshll.u32 [#allocation5], 4
      %s44 = int_to_ptr.vmem [resolvable:$true] %s43
      %49 = dma.hbm_to_vmem [thread:$0]  %s2, 256, %s44, [#allocation6], 128, 128, 8
    $region13: #{tpu_custom_call.1} parent=1 // pred_fallthru
      _
    // Predicated region
    $region14: #{tpu_custom_call.1} parent=1 // pred_check
      _
    $region15: #{tpu_custom_call.1} parent=1 // pred_check_branch
      %51 = sbr.rel (0) target = $region17
    $region16: #{tpu_custom_call.1} parent=1 // pred_region
      _
    $region17: #{tpu_custom_call.1} parent=1 // pred_fallthru
      _
    // Predicated region
    $region18: #{tpu_custom_call.1} parent=1 // pred_check
      _
    $region19: #{tpu_custom_call.1} parent=1 // pred_check_branch
      %53 = sbr.rel (0) target = $region21
    $region20: #{tpu_custom_call.1} parent=1 // pred_region
      _
    $region21: #{tpu_custom_call.1} parent=1 // pred_fallthru
      _
    // Predicated region
    $region22: #{tpu_custom_call.1} parent=1 // pred_check
      _
    $region23: #{tpu_custom_call.1} parent=1 // pred_check_branch
      %55 = sbr.rel (0) target = $region25
    $region24: #{tpu_custom_call.1} parent=1 // pred_region
      %s57 = ssub.s32 16, 16
      %58 = vsyncadd [#allocation6], %s57
      %s60 = sshll.u32 [#allocation7], 4
      %s61 = int_to_ptr.vmem [resolvable:$true] %s60
      %63 = dma.hbm_to_vmem [thread:$0]  %s5, 16, %s61, [#allocation6]
    $region25: #{tpu_custom_call.1} parent=1 // pred_fallthru
      _
    // Predicated region
    $region26: #{tpu_custom_call.1} parent=1 // pred_check
      _
    $region27: #{tpu_custom_call.1} parent=1 // pred_check_branch
      %65 = sbr.rel (0) target = $region29
    $region28: #{tpu_custom_call.1} parent=1 // pred_region
      _
    $region29: #{tpu_custom_call.1} parent=1 // pred_fallthru
      _
    // Predicated region
    $region30: #{tpu_custom_call.1} parent=1 // pred_check
      _
    $region31: #{tpu_custom_call.1} parent=1 // pred_check_branch
      %67 = sbr.rel (0) target = $region33
    $region32: #{tpu_custom_call.1} parent=1 // pred_region
      _
    $region33: #{tpu_custom_call.1} parent=1 // pred_fallthru
      _
    // Predicated region
    $region34: #{tpu_custom_call.1} parent=1 // pred_check
      _
    $region35: #{tpu_custom_call.1} parent=1 // pred_check_branch
      %69 = sbr.rel (0) target = $region37
    $region36: #{tpu_custom_call.1} parent=1 // pred_region
      %s71 = ssub.s32 512, 512
      %72 = vsyncadd [#allocation9], %s71
      %s73 = sshll.u32 [#allocation8], 4
      %s74 = int_to_ptr.vmem [resolvable:$true] %s73
      %79 = dma.hbm_to_vmem [thread:$0]  %s8, 512, %s74, [#allocation9], 128, 128, 8
    $region37: #{tpu_custom_call.1} parent=1 // pred_fallthru
      _
    // Predicated region
    $region38: #{tpu_custom_call.1} parent=1 // pred_check
      _
    $region39: #{tpu_custom_call.1} parent=1 // pred_check_branch
      %81 = sbr.rel (0) target = $region41
    $region40: #{tpu_custom_call.1} parent=1 // pred_region
      _
    $region41: #{tpu_custom_call.1} parent=1 // pred_fallthru
      _
    // Predicated region
    $region42: #{tpu_custom_call.1} parent=1 // pred_check
      _
    $region43: #{tpu_custom_call.1} parent=1 // pred_check_branch
      %83 = sbr.rel (0) target = $region45
    $region44: #{tpu_custom_call.1} parent=1 // pred_region
      %s85 = ssub.s32 512, 512
      %86 = vsyncadd [#allocation9], %s85
      %s87 = sshll.u32 [#allocation10], 4
      %s88 = int_to_ptr.vmem [resolvable:$true] %s87
      %93 = dma.hbm_to_vmem [thread:$0]  %s10, 512, %s88, [#allocation9], 128, 128, 8
    $region45: #{tpu_custom_call.1} parent=1 // pred_fallthru
      _
    // Predicated region
    $region46: #{tpu_custom_call.1} parent=1 // pred_check
      _
    $region47: #{tpu_custom_call.1} parent=1 // pred_check_branch
      %95 = sbr.rel (0) target = $region49
    $region48: #{tpu_custom_call.1} parent=1 // pred_region
      _
    $region49: #{tpu_custom_call.1} parent=1 // pred_fallthru
      _
    // Predicated region
    $region50: #{tpu_custom_call.1} parent=1 // pred_check
      _
    $region51: #{tpu_custom_call.1} parent=1 // pred_check_branch
      %97 = sbr.rel (0) target = $region53
    $region52: #{tpu_custom_call.1} parent=1 // pred_region
      _
    $region53: #{tpu_custom_call.1} parent=1 // pred_fallthru
      _
    // Predicated region
    $region54: #{tpu_custom_call.1} parent=1 // pred_check
      _
    $region55: #{tpu_custom_call.1} parent=1 // pred_check_branch
      %99 = sbr.rel (0) target = $region57
    $region56: #{tpu_custom_call.1} parent=1 // pred_region
      _
    $region57: #{tpu_custom_call.1} parent=1 // pred_fallthru
      _
    // Predicated region
    $region58: #{tpu_custom_call.1} parent=1 // pred_check
      _
    $region59: #{tpu_custom_call.1} parent=1 // pred_check_branch
      %101 = sbr.rel (0) target = $region61
    $region60: #{tpu_custom_call.1} parent=1 // pred_region
      %102 = dma.done [#allocation3], 128
    $region61: #{tpu_custom_call.1} parent=1 // pred_fallthru
      _
    // Predicated region
    $region62: #{tpu_custom_call.1} parent=1 // pred_check
      _
    $region63: #{tpu_custom_call.1} parent=1 // pred_check_branch
      %104 = sbr.rel (0) target = $region65
    $region64: #{tpu_custom_call.1} parent=1 // pred_region
      %105 = dma.done [#allocation6], 256
    $region65: #{tpu_custom_call.1} parent=1 // pred_fallthru
      _
    // Predicated region
    $region66: #{tpu_custom_call.1} parent=1 // pred_check
      _
    $region67: #{tpu_custom_call.1} parent=1 // pred_check_branch
      %107 = sbr.rel (0) target = $region69
    $region68: #{tpu_custom_call.1} parent=1 // pred_region
      %108 = dma.done [#allocation6], 16
    $region69: #{tpu_custom_call.1} parent=1 // pred_fallthru
      _
    // Predicated region
    $region70: #{tpu_custom_call.1} parent=1 // pred_check
      _
    $region71: #{tpu_custom_call.1} parent=1 // pred_check_branch
      %110 = sbr.rel (0) target = $region73
    $region72: #{tpu_custom_call.1} parent=1 // pred_region
      %111 = dma.done [#allocation9], 512
    $region73: #{tpu_custom_call.1} parent=1 // pred_fallthru
      _
    // Predicated region
    $region74: #{tpu_custom_call.1} parent=1 // pred_check
      _
    $region75: #{tpu_custom_call.1} parent=1 // pred_check_branch
      %113 = sbr.rel (0) target = $region77
    $region76: #{tpu_custom_call.1} parent=1 // pred_region
      %114 = dma.done [#allocation9], 512
    $region77: #{tpu_custom_call.1} parent=1 // pred_fallthru
      _
    %v115 = vld [vmem:[#allocation2] sm:$0xff]
    %v116 = vld [vmem:[#allocation5] sm:$0xff]
    %v117 = vld [vmem:[#allocation5 + $0x8] sm:$0xff]
    %v118 = vld [vmem:[%s3] sm:$0x1]
    %v120 = vlaneseq
    %v121 = vshrl.u32 %v120, 7
    %v122 = vsub.s32 0, %v121
    %v123 = vrot.slane %v118, %v122
    %vm125 = vcmask 130048
    %v127 = vsel %vm125, %v115, 0
    %129 = vmatprep.subr.mxu0 0.0
    %130 = vmatpush1.msra.mxu0 %v116
    %131 = vmatprep.subr.mxu0 0.0
    %132 = vmatpush1.msra.mxu0 %v117
    %133 = vmatprep.subr.mxu0 0.0
    %134 = vmatpush1.msra.mxu0 0.0
    %135 = vmatprep.subr.mxu0 0.0
    %136 = vmatpush1.msra.mxu0 0.0
    %137 = vmatprep.subr.mxu0 0.0
    %138 = vmatpush1.msra.mxu0 0.0
    %139 = vmatprep.subr.mxu0 0.0
    %140 = vmatpush1.msra.mxu0 0.0
    %141 = vmatprep.subr.mxu0 0.0
    %142 = vmatpush1.msra.mxu0 0.0
    %143 = vmatprep.subr.mxu0 0.0
    %144 = vmatpush1.msra.mxu0 0.0
    %145 = vmatprep.subr.mxu0 0.0
    %146 = vmatpush1.msra.mxu0 0.0
    %147 = vmatprep.subr.mxu0 0.0
    %148 = vmatpush1.msra.mxu0 0.0
    %149 = vmatprep.subr.mxu0 0.0
    %150 = vmatpush1.msra.mxu0 0.0
    %151 = vmatprep.subr.mxu0 0.0
    %152 = vmatpush1.msra.mxu0 0.0
    %153 = vmatprep.subr.mxu0 0.0
    %154 = vmatpush1.msra.mxu0 0.0
    %155 = vmatprep.subr.mxu0 0.0
    %156 = vmatpush1.msra.mxu0 0.0
    %157 = vmatprep.subr.mxu0 0.0
    %158 = vmatpush1.msra.mxu0 0.0
    %159 = vmatprep.subr.mxu0 0.0
    %160 = vmatpush1.msra.mxu0 0.0
    %161 = vmatprep.subr.mxu0 0.0
    %162 = vmatpush1.msra.mxu0 0.0
    %163 = vmatprep.subr.mxu0 0.0
    %164 = vmatpush1.msra.mxu0 0.0
    %165 = vmatprep.subr.mxu0 0.0
    %166 = vmatpush1.msra.mxu0 0.0
    %167 = vmatprep.subr.mxu0 0.0
    %168 = vmatpush1.msra.mxu0 0.0
    %169 = vmatprep.subr.mxu0 0.0
    %170 = vmatpush1.msra.mxu0 0.0
    %171 = vmatprep.subr.mxu0 0.0
    %172 = vmatpush1.msra.mxu0 0.0
    %173 = vmatprep.subr.mxu0 0.0
    %174 = vmatpush1.msra.mxu0 0.0
    %175 = vmatprep.subr.mxu0 0.0
    %176 = vmatpush1.msra.mxu0 0.0
    %177 = vmatprep.subr.mxu0 0.0
    %178 = vmatpush1.msra.mxu0 0.0
    %179 = vmatprep.subr.mxu0 0.0
    %180 = vmatpush1.msra.mxu0 0.0
    %181 = vmatprep.subr.mxu0 0.0
    %182 = vmatpush1.msra.mxu0 0.0
    %183 = vmatprep.subr.mxu0 0.0
    %184 = vmatpush1.msra.mxu0 0.0
    %185 = vmatprep.subr.mxu0 0.0
    %186 = vmatpush1.msra.mxu0 0.0
    %187 = vmatprep.subr.mxu0 0.0
    %188 = vmatpush1.msra.mxu0 0.0
    %189 = vmatprep.subr.mxu0 0.0
    %190 = vmatpush1.msra.mxu0 0.0
    %191 = vmatprep.subr.mxu0 0.0
    %192 = vmatpush1.msra.mxu0 0.0
    %193 = vmatprep.mubr.f32.mxu0 0.0
    %194 = vmatmul.mubr.f32.gmra.mrb[0].mxu0 %v127
    %v195 = vpop.f32.mrb[0].mxu0
    %v196 = vadd.f32 %v123, %v195
    %v197 = vpop.f32.mrb[0].mxu0
    %198 = vdwg.mxu0
    %vm199 = vcmp.gt.f32.partialorder %v196, 0.0
    %v200 = vmul.f32 %v196, 1.442695
    %v201 = vpow.pop %v200
    %v202 = vsub.f32 %v201, 1.0
    %v203 = vsel %vm199, %v196, %v202
    %v204 = vld [vmem:[%s4] sm:$0xff]
    %v205 = vld [vmem:[%s4 + $0x8] sm:$0xff]
    %v206 = vld [vmem:[%s4 + $0x10] sm:$0xff]
    %v207 = vld [vmem:[%s4 + $0x18] sm:$0xff]
    %v208 = vld [vmem:[#allocation7] sm:$0x1]
    %v210 = vlaneseq
    %v211 = vshrl.u32 %v210, 7
    %v212 = vsub.s32 0, %v211
    %v213 = vrot.slane %v208, %v212
    %vm215 = vcmask 261120
    %v217 = vsel %vm215, %v203, 0
    %219 = vmatprep.subr.mxu0 0.0
    %220 = vmatpush1.msra.mxu0 %v204
    %221 = vmatprep.subr.mxu0 0.0
    %222 = vmatpush1.msra.mxu0 %v205
    %223 = vmatprep.subr.mxu0 0.0
    %224 = vmatpush1.msra.mxu0 %v206
    %225 = vmatprep.subr.mxu0 0.0
    %226 = vmatpush1.msra.mxu0 %v207
    %227 = vmatprep.subr.mxu0 0.0
    %228 = vmatpush1.msra.mxu0 0.0
    %229 = vmatprep.subr.mxu0 0.0
    %230 = vmatpush1.msra.mxu0 0.0
    %231 = vmatprep.subr.mxu0 0.0
    %232 = vmatpush1.msra.mxu0 0.0
    %233 = vmatprep.subr.mxu0 0.0
    %234 = vmatpush1.msra.mxu0 0.0
    %235 = vmatprep.subr.mxu0 0.0
    %236 = vmatpush1.msra.mxu0 0.0
    %237 = vmatprep.subr.mxu0 0.0
    %238 = vmatpush1.msra.mxu0 0.0
    %239 = vmatprep.subr.mxu0 0.0
    %240 = vmatpush1.msra.mxu0 0.0
    %241 = vmatprep.subr.mxu0 0.0
    %242 = vmatpush1.msra.mxu0 0.0
    %243 = vmatprep.subr.mxu0 0.0
    %244 = vmatpush1.msra.mxu0 0.0
    %245 = vmatprep.subr.mxu0 0.0
    %246 = vmatpush1.msra.mxu0 0.0
    %247 = vmatprep.subr.mxu0 0.0
    %248 = vmatpush1.msra.mxu0 0.0
    %249 = vmatprep.subr.mxu0 0.0
    %250 = vmatpush1.msra.mxu0 0.0
    %251 = vmatprep.subr.mxu0 0.0
    %252 = vmatpush1.msra.mxu0 0.0
    %253 = vmatprep.subr.mxu0 0.0
    %254 = vmatpush1.msra.mxu0 0.0
    %255 = vmatprep.subr.mxu0 0.0
    %256 = vmatpush1.msra.mxu0 0.0
    %257 = vmatprep.subr.mxu0 0.0
    %258 = vmatpush1.msra.mxu0 0.0
    %259 = vmatprep.subr.mxu0 0.0
    %260 = vmatpush1.msra.mxu0 0.0
    %261 = vmatprep.subr.mxu0 0.0
    %262 = vmatpush1.msra.mxu0 0.0
    %263 = vmatprep.subr.mxu0 0.0
    %264 = vmatpush1.msra.mxu0 0.0
    %265 = vmatprep.subr.mxu0 0.0
    %266 = vmatpush1.msra.mxu0 0.0
    %267 = vmatprep.subr.mxu0 0.0
    %268 = vmatpush1.msra.mxu0 0.0
    %269 = vmatprep.subr.mxu0 0.0
    %270 = vmatpush1.msra.mxu0 0.0
    %271 = vmatprep.subr.mxu0 0.0
    %272 = vmatpush1.msra.mxu0 0.0
    %273 = vmatprep.subr.mxu0 0.0
    %274 = vmatpush1.msra.mxu0 0.0
    %275 = vmatprep.subr.mxu0 0.0
    %276 = vmatpush1.msra.mxu0 0.0
    %277 = vmatprep.subr.mxu0 0.0
    %278 = vmatpush1.msra.mxu0 0.0
    %279 = vmatprep.subr.mxu0 0.0
    %280 = vmatpush1.msra.mxu0 0.0
    %281 = vmatprep.subr.mxu0 0.0
    %282 = vmatpush1.msra.mxu0 0.0
    %283 = vmatprep.mubr.f32.mxu0 0.0
    %284 = vmatmul.mubr.f32.gmra.mrb[0].mxu0 %v217
    %v285 = vpop.f32.mrb[0].mxu0
    %v286 = vadd.f32 %v213, %v285
    %v287 = vpop.f32.mrb[0].mxu0
    %288 = vdwg.mxu0
    %vm289 = vcmp.gt.f32.partialorder %v286, 0.0
    %v290 = vmul.f32 %v286, 1.442695
    %v291 = vpow.pop %v290
    %v292 = vsub.f32 %v291, 1.0
    %v293 = vsel %vm289, %v286, %v292
    %v294 = vld [vmem:[%s6] sm:$0xff]
    %v295 = vld [vmem:[%s6 + $0x8] sm:$0xff]
    %v296 = vld [vmem:[%s6 + $0x10] sm:$0xff]
    %v297 = vld [vmem:[%s6 + $0x18] sm:$0xff]
    %v298 = vld [vmem:[%s7] sm:$0x1]
    %v300 = vlaneseq
    %v301 = vshrl.u32 %v300, 7
    %v302 = vsub.s32 0, %v301
    %v303 = vrot.slane %v298, %v302
    %v306 = vsel %vm215, %v293, 0
    %308 = vmatprep.subr.mxu0 0.0
    %309 = vmatpush1.msra.mxu0 %v294
    %310 = vmatprep.subr.mxu0 0.0
    %311 = vmatpush1.msra.mxu0 %v295
    %312 = vmatprep.subr.mxu0 0.0
    %313 = vmatpush1.msra.mxu0 %v296
    %314 = vmatprep.subr.mxu0 0.0
    %315 = vmatpush1.msra.mxu0 %v297
    %316 = vmatprep.subr.mxu0 0.0
    %317 = vmatpush1.msra.mxu0 0.0
    %318 = vmatprep.subr.mxu0 0.0
    %319 = vmatpush1.msra.mxu0 0.0
    %320 = vmatprep.subr.mxu0 0.0
    %321 = vmatpush1.msra.mxu0 0.0
    %322 = vmatprep.subr.mxu0 0.0
    %323 = vmatpush1.msra.mxu0 0.0
    %324 = vmatprep.subr.mxu0 0.0
    %325 = vmatpush1.msra.mxu0 0.0
    %326 = vmatprep.subr.mxu0 0.0
    %327 = vmatpush1.msra.mxu0 0.0
    %328 = vmatprep.subr.mxu0 0.0
    %329 = vmatpush1.msra.mxu0 0.0
    %330 = vmatprep.subr.mxu0 0.0
    %331 = vmatpush1.msra.mxu0 0.0
    %332 = vmatprep.subr.mxu0 0.0
    %333 = vmatpush1.msra.mxu0 0.0
    %334 = vmatprep.subr.mxu0 0.0
    %335 = vmatpush1.msra.mxu0 0.0
    %336 = vmatprep.subr.mxu0 0.0
    %337 = vmatpush1.msra.mxu0 0.0
    %338 = vmatprep.subr.mxu0 0.0
    %339 = vmatpush1.msra.mxu0 0.0
    %340 = vmatprep.subr.mxu0 0.0
    %341 = vmatpush1.msra.mxu0 0.0
    %342 = vmatprep.subr.mxu0 0.0
    %343 = vmatpush1.msra.mxu0 0.0
    %344 = vmatprep.subr.mxu0 0.0
    %345 = vmatpush1.msra.mxu0 0.0
    %346 = vmatprep.subr.mxu0 0.0
    %347 = vmatpush1.msra.mxu0 0.0
    %348 = vmatprep.subr.mxu0 0.0
    %349 = vmatpush1.msra.mxu0 0.0
    %350 = vmatprep.subr.mxu0 0.0
    %351 = vmatpush1.msra.mxu0 0.0
    %352 = vmatprep.subr.mxu0 0.0
    %353 = vmatpush1.msra.mxu0 0.0
    %354 = vmatprep.subr.mxu0 0.0
    %355 = vmatpush1.msra.mxu0 0.0
    %356 = vmatprep.subr.mxu0 0.0
    %357 = vmatpush1.msra.mxu0 0.0
    %358 = vmatprep.subr.mxu0 0.0
    %359 = vmatpush1.msra.mxu0 0.0
    %360 = vmatprep.subr.mxu0 0.0
    %361 = vmatpush1.msra.mxu0 0.0
    %362 = vmatprep.subr.mxu0 0.0
    %363 = vmatpush1.msra.mxu0 0.0
    %364 = vmatprep.subr.mxu0 0.0
    %365 = vmatpush1.msra.mxu0 0.0
    %366 = vmatprep.subr.mxu0 0.0
    %367 = vmatpush1.msra.mxu0 0.0
    %368 = vmatprep.subr.mxu0 0.0
    %369 = vmatpush1.msra.mxu0 0.0
    %370 = vmatprep.subr.mxu0 0.0
    %371 = vmatpush1.msra.mxu0 0.0
    %372 = vmatprep.mubr.f32.mxu0 0.0
    %373 = vmatmul.mubr.f32.gmra.mrb[0].mxu0 %v306
    %v374 = vpop.f32.mrb[0].mxu0
    %v375 = vadd.f32 %v303, %v374
    %v376 = vpop.f32.mrb[0].mxu0
    %377 = vdwg.mxu0
    %vm378 = vcmp.gt.f32.partialorder %v375, 0.0
    %v379 = vmul.f32 %v375, 1.442695
    %v380 = vpow.pop %v379
    %v381 = vsub.f32 %v380, 1.0
    %v382 = vsel %vm378, %v375, %v381
    %v383 = vld [vmem:[#allocation8] sm:$0xff]
    %v384 = vld [vmem:[#allocation8 + $0x8] sm:$0xff]
    %v385 = vld [vmem:[#allocation8 + $0x10] sm:$0xff]
    %v386 = vld [vmem:[#allocation8 + $0x18] sm:$0xff]
    %v387 = vld [vmem:[%s9] sm:$0x1]
    %v389 = vlaneseq
    %v390 = vshrl.u32 %v389, 7
    %v391 = vsub.s32 0, %v390
    %v392 = vrot.slane %v387, %v391
    %v395 = vsel %vm215, %v382, 0
    %397 = vmatprep.subr.mxu0 0.0
    %398 = vmatpush1.msra.mxu0 %v383
    %399 = vmatprep.subr.mxu0 0.0
    %400 = vmatpush1.msra.mxu0 %v384
    %401 = vmatprep.subr.mxu0 0.0
    %402 = vmatpush1.msra.mxu0 %v385
    %403 = vmatprep.subr.mxu0 0.0
    %404 = vmatpush1.msra.mxu0 %v386
    %405 = vmatprep.subr.mxu0 0.0
    %406 = vmatpush1.msra.mxu0 0.0
    %407 = vmatprep.subr.mxu0 0.0
    %408 = vmatpush1.msra.mxu0 0.0
    %409 = vmatprep.subr.mxu0 0.0
    %410 = vmatpush1.msra.mxu0 0.0
    %411 = vmatprep.subr.mxu0 0.0
    %412 = vmatpush1.msra.mxu0 0.0
    %413 = vmatprep.subr.mxu0 0.0
    %414 = vmatpush1.msra.mxu0 0.0
    %415 = vmatprep.subr.mxu0 0.0
    %416 = vmatpush1.msra.mxu0 0.0
    %417 = vmatprep.subr.mxu0 0.0
    %418 = vmatpush1.msra.mxu0 0.0
    %419 = vmatprep.subr.mxu0 0.0
    %420 = vmatpush1.msra.mxu0 0.0
    %421 = vmatprep.subr.mxu0 0.0
    %422 = vmatpush1.msra.mxu0 0.0
    %423 = vmatprep.subr.mxu0 0.0
    %424 = vmatpush1.msra.mxu0 0.0
    %425 = vmatprep.subr.mxu0 0.0
    %426 = vmatpush1.msra.mxu0 0.0
    %427 = vmatprep.subr.mxu0 0.0
    %428 = vmatpush1.msra.mxu0 0.0
    %429 = vmatprep.subr.mxu0 0.0
    %430 = vmatpush1.msra.mxu0 0.0
    %431 = vmatprep.subr.mxu0 0.0
    %432 = vmatpush1.msra.mxu0 0.0
    %433 = vmatprep.subr.mxu0 0.0
    %434 = vmatpush1.msra.mxu0 0.0
    %435 = vmatprep.subr.mxu0 0.0
    %436 = vmatpush1.msra.mxu0 0.0
    %437 = vmatprep.subr.mxu0 0.0
    %438 = vmatpush1.msra.mxu0 0.0
    %439 = vmatprep.subr.mxu0 0.0
    %440 = vmatpush1.msra.mxu0 0.0
    %441 = vmatprep.subr.mxu0 0.0
    %442 = vmatpush1.msra.mxu0 0.0
    %443 = vmatprep.subr.mxu0 0.0
    %444 = vmatpush1.msra.mxu0 0.0
    %445 = vmatprep.subr.mxu0 0.0
    %446 = vmatpush1.msra.mxu0 0.0
    %447 = vmatprep.subr.mxu0 0.0
    %448 = vmatpush1.msra.mxu0 0.0
    %449 = vmatprep.subr.mxu0 0.0
    %450 = vmatpush1.msra.mxu0 0.0
    %451 = vmatprep.subr.mxu0 0.0
    %452 = vmatpush1.msra.mxu0 0.0
    %453 = vmatprep.subr.mxu0 0.0
    %454 = vmatpush1.msra.mxu0 0.0
    %455 = vmatprep.subr.mxu0 0.0
    %456 = vmatpush1.msra.mxu0 0.0
    %457 = vmatprep.subr.mxu0 0.0
    %458 = vmatpush1.msra.mxu0 0.0
    %459 = vmatprep.subr.mxu0 0.0
    %460 = vmatpush1.msra.mxu0 0.0
    %461 = vmatprep.mubr.f32.mxu0 0.0
    %462 = vmatmul.mubr.f32.gmra.mrb[0].mxu0 %v395
    %v463 = vpop.f32.mrb[0].mxu0
    %v464 = vadd.f32 %v392, %v463
    %v465 = vpop.f32.mrb[0].mxu0
    %466 = vdwg.mxu0
    %467 = vst.msk [vmem:[#allocation11] sm:$0xff] %vm215, %v464
    %v468 = vld [vmem:[#allocation10] sm:$0xff]
    %v469 = vld [vmem:[#allocation10 + $0x8] sm:$0xff]
    %v470 = vld [vmem:[#allocation10 + $0x10] sm:$0xff]
    %v471 = vld [vmem:[#allocation10 + $0x18] sm:$0xff]
    %v472 = vld [vmem:[%s11] sm:$0x1]
    %v474 = vlaneseq
    %v475 = vshrl.u32 %v474, 7
    %v476 = vsub.s32 0, %v475
    %v477 = vrot.slane %v472, %v476
    %v480 = vsel %vm215, %v464, 0
    %482 = vmatprep.subr.mxu0 0.0
    %483 = vmatpush1.msra.mxu0 %v468
    %484 = vmatprep.subr.mxu0 0.0
    %485 = vmatpush1.msra.mxu0 %v469
    %486 = vmatprep.subr.mxu0 0.0
    %487 = vmatpush1.msra.mxu0 %v470
    %488 = vmatprep.subr.mxu0 0.0
    %489 = vmatpush1.msra.mxu0 %v471
    %490 = vmatprep.subr.mxu0 0.0
    %491 = vmatpush1.msra.mxu0 0.0
    %492 = vmatprep.subr.mxu0 0.0
    %493 = vmatpush1.msra.mxu0 0.0
    %494 = vmatprep.subr.mxu0 0.0
    %495 = vmatpush1.msra.mxu0 0.0
    %496 = vmatprep.subr.mxu0 0.0
    %497 = vmatpush1.msra.mxu0 0.0
    %498 = vmatprep.subr.mxu0 0.0
    %499 = vmatpush1.msra.mxu0 0.0
    %500 = vmatprep.subr.mxu0 0.0
    %501 = vmatpush1.msra.mxu0 0.0
    %502 = vmatprep.subr.mxu0 0.0
    %503 = vmatpush1.msra.mxu0 0.0
    %504 = vmatprep.subr.mxu0 0.0
    %505 = vmatpush1.msra.mxu0 0.0
    %506 = vmatprep.subr.mxu0 0.0
    %507 = vmatpush1.msra.mxu0 0.0
    %508 = vmatprep.subr.mxu0 0.0
    %509 = vmatpush1.msra.mxu0 0.0
    %510 = vmatprep.subr.mxu0 0.0
    %511 = vmatpush1.msra.mxu0 0.0
    %512 = vmatprep.subr.mxu0 0.0
    %513 = vmatpush1.msra.mxu0 0.0
    %514 = vmatprep.subr.mxu0 0.0
    %515 = vmatpush1.msra.mxu0 0.0
    %516 = vmatprep.subr.mxu0 0.0
    %517 = vmatpush1.msra.mxu0 0.0
    %518 = vmatprep.subr.mxu0 0.0
    %519 = vmatpush1.msra.mxu0 0.0
    %520 = vmatprep.subr.mxu0 0.0
    %521 = vmatpush1.msra.mxu0 0.0
    %522 = vmatprep.subr.mxu0 0.0
    %523 = vmatpush1.msra.mxu0 0.0
    %524 = vmatprep.subr.mxu0 0.0
    %525 = vmatpush1.msra.mxu0 0.0
    %526 = vmatprep.subr.mxu0 0.0
    %527 = vmatpush1.msra.mxu0 0.0
    %528 = vmatprep.subr.mxu0 0.0
    %529 = vmatpush1.msra.mxu0 0.0
    %530 = vmatprep.subr.mxu0 0.0
    %531 = vmatpush1.msra.mxu0 0.0
    %532 = vmatprep.subr.mxu0 0.0
    %533 = vmatpush1.msra.mxu0 0.0
    %534 = vmatprep.subr.mxu0 0.0
    %535 = vmatpush1.msra.mxu0 0.0
    %536 = vmatprep.subr.mxu0 0.0
    %537 = vmatpush1.msra.mxu0 0.0
    %538 = vmatprep.subr.mxu0 0.0
    %539 = vmatpush1.msra.mxu0 0.0
    %540 = vmatprep.subr.mxu0 0.0
    %541 = vmatpush1.msra.mxu0 0.0
    %542 = vmatprep.subr.mxu0 0.0
    %543 = vmatpush1.msra.mxu0 0.0
    %544 = vmatprep.subr.mxu0 0.0
    %545 = vmatpush1.msra.mxu0 0.0
    %546 = vmatprep.mubr.f32.mxu0 0.0
    %547 = vmatmul.mubr.f32.gmra.mrb[0].mxu0 %v480
    %v548 = vpop.f32.mrb[0].mxu0
    %v549 = vadd.f32 %v477, %v548
    %v550 = vpop.f32.mrb[0].mxu0
    %551 = vdwg.mxu0
    %v552 = vld [vmem:[%s12] sm:$0xff]
    %v553 = vld [vmem:[%s12 + $0x8] sm:$0xff]
    %v554 = vld [vmem:[%s12 + $0x10] sm:$0xff]
    %v555 = vld [vmem:[%s12 + $0x18] sm:$0xff]
    %v556 = vld [vmem:[%s13] sm:$0x1]
    %v558 = vlaneseq
    %v559 = vshrl.u32 %v558, 7
    %v560 = vsub.s32 0, %v559
    %v561 = vrot.slane %v556, %v560
    %v564 = vsel %vm215, %v549, 0
    %566 = vmatprep.subr.mxu0 0.0
    %567 = vmatpush1.msra.mxu0 %v552
    %568 = vmatprep.subr.mxu0 0.0
    %569 = vmatpush1.msra.mxu0 %v553
    %570 = vmatprep.subr.mxu0 0.0
    %571 = vmatpush1.msra.mxu0 %v554
    %572 = vmatprep.subr.mxu0 0.0
    %573 = vmatpush1.msra.mxu0 %v555
    %574 = vmatprep.subr.mxu0 0.0
    %575 = vmatpush1.msra.mxu0 0.0
    %576 = vmatprep.subr.mxu0 0.0
    %577 = vmatpush1.msra.mxu0 0.0
    %578 = vmatprep.subr.mxu0 0.0
    %579 = vmatpush1.msra.mxu0 0.0
    %580 = vmatprep.subr.mxu0 0.0
    %581 = vmatpush1.msra.mxu0 0.0
    %582 = vmatprep.subr.mxu0 0.0
    %583 = vmatpush1.msra.mxu0 0.0
    %584 = vmatprep.subr.mxu0 0.0
    %585 = vmatpush1.msra.mxu0 0.0
    %586 = vmatprep.subr.mxu0 0.0
    %587 = vmatpush1.msra.mxu0 0.0
    %588 = vmatprep.subr.mxu0 0.0
    %589 = vmatpush1.msra.mxu0 0.0
    %590 = vmatprep.subr.mxu0 0.0
    %591 = vmatpush1.msra.mxu0 0.0
    %592 = vmatprep.subr.mxu0 0.0
    %593 = vmatpush1.msra.mxu0 0.0
    %594 = vmatprep.subr.mxu0 0.0
    %595 = vmatpush1.msra.mxu0 0.0
    %596 = vmatprep.subr.mxu0 0.0
    %597 = vmatpush1.msra.mxu0 0.0
    %598 = vmatprep.subr.mxu0 0.0
    %599 = vmatpush1.msra.mxu0 0.0
    %600 = vmatprep.subr.mxu0 0.0
    %601 = vmatpush1.msra.mxu0 0.0
    %602 = vmatprep.subr.mxu0 0.0
    %603 = vmatpush1.msra.mxu0 0.0
    %604 = vmatprep.subr.mxu0 0.0
    %605 = vmatpush1.msra.mxu0 0.0
    %606 = vmatprep.subr.mxu0 0.0
    %607 = vmatpush1.msra.mxu0 0.0
    %608 = vmatprep.subr.mxu0 0.0
    %609 = vmatpush1.msra.mxu0 0.0
    %610 = vmatprep.subr.mxu0 0.0
    %611 = vmatpush1.msra.mxu0 0.0
    %612 = vmatprep.subr.mxu0 0.0
    %613 = vmatpush1.msra.mxu0 0.0
    %614 = vmatprep.subr.mxu0 0.0
    %615 = vmatpush1.msra.mxu0 0.0
    %616 = vmatprep.subr.mxu0 0.0
    %617 = vmatpush1.msra.mxu0 0.0
    %618 = vmatprep.subr.mxu0 0.0
    %619 = vmatpush1.msra.mxu0 0.0
    %620 = vmatprep.subr.mxu0 0.0
    %621 = vmatpush1.msra.mxu0 0.0
    %622 = vmatprep.subr.mxu0 0.0
    %623 = vmatpush1.msra.mxu0 0.0
    %624 = vmatprep.subr.mxu0 0.0
    %625 = vmatpush1.msra.mxu0 0.0
    %626 = vmatprep.subr.mxu0 0.0
    %627 = vmatpush1.msra.mxu0 0.0
    %628 = vmatprep.subr.mxu0 0.0
    %629 = vmatpush1.msra.mxu0 0.0
    %630 = vmatprep.mubr.f32.mxu0 0.0
    %631 = vmatmul.mubr.f32.gmra.mrb[0].mxu0 %v564
    %v632 = vpop.f32.mrb[0].mxu0
    %v633 = vadd.f32 %v561, %v632
    %v634 = vpop.f32.mrb[0].mxu0
    %635 = vdwg.mxu0
    %vm636 = vcmask 15360
    %637 = vst.msk [vmem:[%s15] sm:$0xff] %vm636, %v633
    %v638 = vlaneseq
    %v639 = vand.u32 %v638, 127
    %v640 = vld [vmem:[%s1] sm:$0xff]
    %641 = vset.pattern.permute.xlu0 0
    %642 = vperm.xlu0 %641, %v640
    %v643 = vpop.permute.xlu0 %642
    %vm644 = vcmp.eq.s32.totalorder %v639, %v643
    %v645 = vsel %vm644, %v633, 0.0
    %v646 = vsel %vm636, %v645, 0.0
    %647 = vadd.xlane.f32.xlu0 %v646
    %v648 = vpop.xlane.xlu0 %647
    %vm649 = vcmask 7168
    %650 = vst.msk [vmem:[%s16] sm:$0xff] %vm649, %v648
    // Predicated region
    $region78: #{tpu_custom_call.1} parent=1 // pred_check
      _
    $region79: #{tpu_custom_call.1} parent=1 // pred_check_branch
      %652 = sbr.rel (0) target = $region81
    $region80: #{tpu_custom_call.1} parent=1 // pred_region
      %s654 = ssub.s32 128, 128
      %655 = vsyncadd [#allocation4], %s654
      %s657 = sshll.u32 [#allocation11], 4
      %s658 = int_to_ptr.vmem [resolvable:$true] %s657
      %660 = dma.vmem_to_hbm [thread:$0]  %s658, 128, %s14, [#allocation4]
    $region81: #{tpu_custom_call.1} parent=1 // pred_fallthru
      _
    // Predicated region
    $region82: #{tpu_custom_call.1} parent=1 // pred_check
      _
    $region83: #{tpu_custom_call.1} parent=1 // pred_check_branch
      %662 = sbr.rel (0) target = $region85
    $region84: #{tpu_custom_call.1} parent=1 // pred_region
      _
    $region85: #{tpu_custom_call.1} parent=1 // pred_fallthru
      _
    // Predicated region
    $region86: #{tpu_custom_call.1} parent=1 // pred_check
      _
    $region87: #{tpu_custom_call.1} parent=1 // pred_check_branch
      %664 = sbr.rel (0) target = $region89
    $region88: #{tpu_custom_call.1} parent=1 // pred_region
      _
    $region89: #{tpu_custom_call.1} parent=1 // pred_fallthru
      _
    // Predicated region
    $region90: #{tpu_custom_call.1} parent=1 // pred_check
      _
    $region91: #{tpu_custom_call.1} parent=1 // pred_check_branch
      %666 = sbr.rel (0) target = $region93
    $region92: #{tpu_custom_call.1} parent=1 // pred_region
      %667 = dma.done [#allocation4], 128
    $region93: #{tpu_custom_call.1} parent=1 // pred_fallthru
      _
    // Predicated region
    $region94: #{tpu_custom_call.1} parent=1 // pred_check
      _
    $region95: #{tpu_custom_call.1} parent=1 // pred_check_branch
      %669 = sbr.rel (0) target = $region97
    $region96: #{tpu_custom_call.1} parent=1 // pred_region
      _
    $region97: #{tpu_custom_call.1} parent=1 // pred_fallthru
      _
    // Predicated region
    $region98: #{tpu_custom_call.1} parent=1 // pred_check
      _
    $region99: #{tpu_custom_call.1} parent=1 // pred_check_branch
      %671 = sbr.rel (0) target = $region101
    $region100: #{tpu_custom_call.1} parent=1 // pred_region
      _
    $region101: #{tpu_custom_call.1} parent=1 // pred_fallthru
      _
    %672 = vsyncpa [#allocation3], 1
    %673 = vsyncpa [#allocation6], 1
    %674 = vsyncpa [#allocation9], 1
    %675 = vsyncpa [#allocation4], 1

</llo_original>
